<compile_context>
chip_gen: v7x
topology: tpu7x:2x2x1
jax: 0.10.0
libtpu: 0.0.40
codegen_flags: <defaults>
</compile_context>

<pallas_src>
import functools

import jax
import jax.numpy as jnp
from jax.experimental import pallas as pl
from jax.experimental.pallas import tpu as pltpu


def _simple_rnn_kernel(x_ref, npar_ref, wpar_ref, out_ref, *, L):
    # x_ref:    (T*N, D)           time-major flattened input (row = t*N + n)
    # npar_ref: (L*M + D + 1, L*M) packed: [Wblk ; Wih0_wide ; bias_cat]
    # wpar_ref: (L*M + 1, Kp)      packed: [Wfc_wide ; bfc]   (Kp = 128)
    # out_ref:  (N, Kp)
    TN, D = x_ref.shape
    LM = npar_ref.shape[1]
    N, _ = out_ref.shape
    T = TN // N
    M = LM // L

    # ---- carve packed constants (one-time VMEM loads, off the critical path) --
    wblk = npar_ref[0:LM, :]                      # (LM, LM) block recurrence weight
    wih0 = npar_ref[LM:LM + D, :]                 # (D, LM)  layer-0 Wih^T, zero-padded
    bcat = npar_ref[LM + D:LM + D + 1, :]         # (1, LM)  fused (b_ih + b_hh) per layer
    wfc = wpar_ref[0:LM, :]                       # (LM, Kp) fc wt; only last M rows nonzero
    bfc = wpar_ref[LM:LM + 1, :]                  # (1, Kp)

    # ---- hoisted layer-0 projection + biases for the WHOLE sequence (1 dot) ---
    #   A[t*N:(t+1)*N, 0:M]      = x_t @ Wih0^T + (b_ih0 + b_hh0)
    #   A[:, l*M:(l+1)*M], l>=1  = b_ih_l + b_hh_l
    a = jnp.dot(x_ref[...], wih0, preferred_element_type=jnp.float32) + bcat

    # bf16 operands for the serialized MXU chain; accumulation & elementwise in f32.
    wblk_bf = wblk.astype(jnp.bfloat16)

    col = jax.lax.broadcasted_iota(jnp.int32, (N, LM), 1)

    # ---- wavefront recurrence: S_k = [h0_k, h1_{k-1}, ..., h_{L-1, k-L+1}] ----
    s = jnp.maximum(a[0:N], 0.0)
    s = jnp.where(col < M, s, 0.0)                # initial hidden states are zero
    for k in range(1, T):
        z = jnp.dot(s.astype(jnp.bfloat16), wblk_bf,
                    preferred_element_type=jnp.float32)
        s = jnp.maximum(a[k * N:(k + 1) * N] + z, 0.0)
        if k < L - 1:                             # zero layers that have not started yet
            s = jnp.where(col < (k + 1) * M, s, 0.0)
    # Drain L-1 wavefront steps so the top layer reaches time T-1.  The layer-0
    # slot receives garbage (as if x_T = 0) that never reaches the output.
    for _ in range(L - 1):
        z = jnp.dot(s.astype(jnp.bfloat16), wblk_bf,
                    preferred_element_type=jnp.float32)
        s = jnp.maximum(bcat + z, 0.0)

    # ---- fc head on h_{L-1, T-1}: rows of wfc outside the top layer are zero,
    # so the full-state dot is exact, and the (N, 128) store is lane-dense.
    out_ref[...] = jnp.dot(s, wfc, preferred_element_type=jnp.float32) + bfc


@functools.partial(jax.jit, static_argnames=("n_layers", "k_out"))
def simple_rnn_forward(x, nparams, wparams, *, n_layers, k_out):
    """x: (N, T, D) float32 -> (N, k_out) float32."""
    N, T, D = x.shape
    Kp = wparams.shape[1]
    # Time-major flatten only — no feature zero-padding, no (N, T, M) inflation.
    x_tm = jnp.transpose(x.astype(jnp.float32), (1, 0, 2)).reshape(T * N, D)
    vmem = pl.BlockSpec(memory_space=pltpu.MemorySpace.VMEM)
    out_padded = pl.pallas_call(
        functools.partial(_simple_rnn_kernel, L=n_layers),
        out_shape=jax.ShapeDtypeStruct((N, Kp), jnp.float32),
        in_specs=[vmem, vmem, vmem],
        out_specs=vmem,
    )(x_tm, nparams, wparams)
    return out_padded[:, :k_out]


def init_params(key, D, M, L, K, Kp=128):
    """PyTorch-default-like init (uniform(-1/sqrt(M), 1/sqrt(M))), packed for the kernel."""
    keys = jax.random.split(key, 4 * L + 2)
    bound = 1.0 / float(M) ** 0.5
    LM = L * M
    wblk = jnp.zeros((LM, LM), jnp.float32)
    wih0w = jnp.zeros((D, LM), jnp.float32)
    bcat = jnp.zeros((1, LM), jnp.float32)
    raw = {"w_ih": [], "w_hh": [], "b_ih": [], "b_hh": []}
    for l in range(L):
        d_in = D if l == 0 else M
        w_ih = jax.random.uniform(keys[4 * l + 0], (M, d_in), jnp.float32, -bound, bound)
        w_hh = jax.random.uniform(keys[4 * l + 1], (M, M), jnp.float32, -bound, bound)
        b_ih = jax.random.uniform(keys[4 * l + 2], (M,), jnp.float32, -bound, bound)
        b_hh = jax.random.uniform(keys[4 * l + 3], (M,), jnp.float32, -bound, bound)
        raw["w_ih"].append(w_ih)
        raw["w_hh"].append(w_hh)
        raw["b_ih"].append(b_ih)
        raw["b_hh"].append(b_hh)
        if l == 0:
            wih0w = wih0w.at[:, 0:M].set(w_ih.T)
        else:
            wblk = wblk.at[(l - 1) * M:l * M, l * M:(l + 1) * M].set(w_ih.T)
        wblk = wblk.at[l * M:(l + 1) * M, l * M:(l + 1) * M].set(w_hh.T)
        bcat = bcat.at[0, l * M:(l + 1) * M].set(b_ih + b_hh)
    w_fc = jax.random.uniform(keys[-2], (K, M), jnp.float32, -bound, bound)
    b_fc = jax.random.uniform(keys[-1], (K,), jnp.float32, -bound, bound)
    raw["w_fc"] = w_fc
    raw["b_fc"] = b_fc
    wfcw = jnp.zeros((LM, Kp), jnp.float32).at[(L - 1) * M:, 0:K].set(w_fc.T)
    bfc = jnp.zeros((1, Kp), jnp.float32).at[0, 0:K].set(b_fc)
    nparams = jnp.concatenate([wblk, wih0w, bcat], axis=0)     # (LM + D + 1, LM)
    wparams = jnp.concatenate([wfcw, bfc], axis=0)             # (LM + 1, Kp)
    return nparams, wparams, raw


def reference_forward(x, raw, k_out):
    """Pure-JAX f32 reference with PyTorch nn.RNN(relu, batch_first) + Linear semantics."""
    N, T, D = x.shape
    L = len(raw["w_hh"])
    M = raw["w_hh"][0].shape[0]
    h = [jnp.zeros((N, M), jnp.float32) for _ in range(L)]
    for t in range(T):
        inp = x[:, t, :].astype(jnp.float32)
        for l in range(L):
            pre = (inp @ raw["w_ih"][l].T + raw["b_ih"][l]
                   + h[l] @ raw["w_hh"][l].T + raw["b_hh"][l])
            h[l] = jnp.maximum(pre, 0.0)
            inp = h[l]
    out = h[L - 1] @ raw["w_fc"].T + raw["b_fc"]
    return out[:, :k_out]


if __name__ == "__main__":
    # Shapes implied by the script: X.reshape(-1, T, 1) -> D = 1, T = 10.
    N, T, D = 8, 10, 1
    M, L, K = 32, 2, 1

    key = jax.random.PRNGKey(0)
    k_x, k_p = jax.random.split(key)
    x = jax.random.normal(k_x, (N, T, D), jnp.float32)
    nparams, wparams, raw = init_params(k_p, D, M, L, K)

    out = jax.block_until_ready(
        simple_rnn_forward(x, nparams, wparams, n_layers=L, k_out=K))
    ref = reference_forward(x, raw, K)

    assert out.shape == (N, K)
    # Loosened tolerance per review: recurrence dots use bf16 operands (f32 accum).
    assert jnp.allclose(out, ref, rtol=2e-2, atol=2e-2), (out, ref)
    print("KERNEL_OK")
</pallas_src>

<mosaic_0001>
module attributes {stable_mosaic.version = 11 : i64} {
  func.func @_simple_rnn_kernel(%arg0: memref<80x1xf32, #tpu.memory_space<vmem>>, %arg1: memref<66x64xf32, #tpu.memory_space<vmem>>, %arg2: memref<65x128xf32, #tpu.memory_space<vmem>>, %arg3: memref<8x128xf32, #tpu.memory_space<vmem>>) attributes {dimension_semantics = [], scalar_prefetch = 0 : i64, scratch_operands = 0 : i64, tpu.core_type = #tpu.core_type<tc>} {
    %c0 = arith.constant 0 : index
    %c0_0 = arith.constant 0 : index
    %0 = vector.load %arg1[%c0, %c0_0] : memref<66x64xf32, #tpu.memory_space<vmem>>, vector<64x64xf32>
    %c64 = arith.constant 64 : index
    %c0_1 = arith.constant 0 : index
    %1 = vector.load %arg1[%c64, %c0_1] : memref<66x64xf32, #tpu.memory_space<vmem>>, vector<1x64xf32>
    %c65 = arith.constant 65 : index
    %c0_2 = arith.constant 0 : index
    %2 = vector.load %arg1[%c65, %c0_2] : memref<66x64xf32, #tpu.memory_space<vmem>>, vector<1x64xf32>
    %c0_3 = arith.constant 0 : index
    %c0_4 = arith.constant 0 : index
    %3 = vector.load %arg2[%c0_3, %c0_4] : memref<65x128xf32, #tpu.memory_space<vmem>>, vector<64x128xf32>
    %c64_5 = arith.constant 64 : index
    %c0_6 = arith.constant 0 : index
    %4 = vector.load %arg2[%c64_5, %c0_6] : memref<65x128xf32, #tpu.memory_space<vmem>>, vector<1x128xf32>
    %c0_7 = arith.constant 0 : index
    %c0_8 = arith.constant 0 : index
    %5 = vector.load %arg0[%c0_7, %c0_8] : memref<80x1xf32, #tpu.memory_space<vmem>>, vector<80x1xf32>
    %cst = arith.constant dense<0.000000e+00> : vector<80x64xf32>
    %6 = tpu.matmul %5, %1, %cst {dimension_numbers = #tpu.dot_dimension_numbers<[1], [0], [0], [1], [0, 0, 1, 1], [], []>} : vector<80x1xf32>, vector<1x64xf32>, vector<80x64xf32> -> vector<80x64xf32>
    %7 = vector.broadcast %2 : vector<1x64xf32> to vector<80x64xf32>
    %8 = arith.addf %6, %7 : vector<80x64xf32>
    %9 = arith.truncf %0 : vector<64x64xf32> to vector<64x64xbf16>
    %10 = tpu.iota {dimensions = array<i32: 1>} : vector<8x64xi32>
    %11 = vector.extract_strided_slice %8 {offsets = [0, 0], sizes = [8, 64], strides = [1, 1]} : vector<80x64xf32> to vector<8x64xf32>
    %cst_9 = arith.constant 0.000000e+00 : f32
    %12 = vector.broadcast %cst_9 : f32 to vector<8x64xf32>
    %13 = arith.maximumf %11, %12 : vector<8x64xf32>
    %c32_i32 = arith.constant 32 : i32
    %14 = vector.broadcast %c32_i32 : i32 to vector<8x64xi32>
    %15 = arith.cmpi slt, %10, %14 : vector<8x64xi32>
    %cst_10 = arith.constant 0.000000e+00 : f32
    %16 = vector.broadcast %cst_10 : f32 to vector<8x64xf32>
    %17 = arith.select %15, %13, %16 : vector<8x64xi1>, vector<8x64xf32>
    %18 = arith.truncf %17 : vector<8x64xf32> to vector<8x64xbf16>
    %cst_11 = arith.constant dense<0.000000e+00> : vector<8x64xf32>
    %19 = tpu.matmul %18, %9, %cst_11 {dimension_numbers = #tpu.dot_dimension_numbers<[1], [0], [0], [1], [0, 0, 1, 1], [], []>} : vector<8x64xbf16>, vector<64x64xbf16>, vector<8x64xf32> -> vector<8x64xf32>
    %20 = vector.extract_strided_slice %8 {offsets = [8, 0], sizes = [8, 64], strides = [1, 1]} : vector<80x64xf32> to vector<8x64xf32>
    %21 = arith.addf %20, %19 : vector<8x64xf32>
    %cst_12 = arith.constant 0.000000e+00 : f32
    %22 = vector.broadcast %cst_12 : f32 to vector<8x64xf32>
    %23 = arith.maximumf %21, %22 : vector<8x64xf32>
    %24 = arith.truncf %23 : vector<8x64xf32> to vector<8x64xbf16>
    %cst_13 = arith.constant dense<0.000000e+00> : vector<8x64xf32>
    %25 = tpu.matmul %24, %9, %cst_13 {dimension_numbers = #tpu.dot_dimension_numbers<[1], [0], [0], [1], [0, 0, 1, 1], [], []>} : vector<8x64xbf16>, vector<64x64xbf16>, vector<8x64xf32> -> vector<8x64xf32>
    %26 = vector.extract_strided_slice %8 {offsets = [16, 0], sizes = [8, 64], strides = [1, 1]} : vector<80x64xf32> to vector<8x64xf32>
    %27 = arith.addf %26, %25 : vector<8x64xf32>
    %cst_14 = arith.constant 0.000000e+00 : f32
    %28 = vector.broadcast %cst_14 : f32 to vector<8x64xf32>
    %29 = arith.maximumf %27, %28 : vector<8x64xf32>
    %30 = arith.truncf %29 : vector<8x64xf32> to vector<8x64xbf16>
    %cst_15 = arith.constant dense<0.000000e+00> : vector<8x64xf32>
    %31 = tpu.matmul %30, %9, %cst_15 {dimension_numbers = #tpu.dot_dimension_numbers<[1], [0], [0], [1], [0, 0, 1, 1], [], []>} : vector<8x64xbf16>, vector<64x64xbf16>, vector<8x64xf32> -> vector<8x64xf32>
    %32 = vector.extract_strided_slice %8 {offsets = [24, 0], sizes = [8, 64], strides = [1, 1]} : vector<80x64xf32> to vector<8x64xf32>
    %33 = arith.addf %32, %31 : vector<8x64xf32>
    %cst_16 = arith.constant 0.000000e+00 : f32
    %34 = vector.broadcast %cst_16 : f32 to vector<8x64xf32>
    %35 = arith.maximumf %33, %34 : vector<8x64xf32>
    %36 = arith.truncf %35 : vector<8x64xf32> to vector<8x64xbf16>
    %cst_17 = arith.constant dense<0.000000e+00> : vector<8x64xf32>
    %37 = tpu.matmul %36, %9, %cst_17 {dimension_numbers = #tpu.dot_dimension_numbers<[1], [0], [0], [1], [0, 0, 1, 1], [], []>} : vector<8x64xbf16>, vector<64x64xbf16>, vector<8x64xf32> -> vector<8x64xf32>
    %38 = vector.extract_strided_slice %8 {offsets = [32, 0], sizes = [8, 64], strides = [1, 1]} : vector<80x64xf32> to vector<8x64xf32>
    %39 = arith.addf %38, %37 : vector<8x64xf32>
    %cst_18 = arith.constant 0.000000e+00 : f32
    %40 = vector.broadcast %cst_18 : f32 to vector<8x64xf32>
    %41 = arith.maximumf %39, %40 : vector<8x64xf32>
    %42 = arith.truncf %41 : vector<8x64xf32> to vector<8x64xbf16>
    %cst_19 = arith.constant dense<0.000000e+00> : vector<8x64xf32>
    %43 = tpu.matmul %42, %9, %cst_19 {dimension_numbers = #tpu.dot_dimension_numbers<[1], [0], [0], [1], [0, 0, 1, 1], [], []>} : vector<8x64xbf16>, vector<64x64xbf16>, vector<8x64xf32> -> vector<8x64xf32>
    %44 = vector.extract_strided_slice %8 {offsets = [40, 0], sizes = [8, 64], strides = [1, 1]} : vector<80x64xf32> to vector<8x64xf32>
    %45 = arith.addf %44, %43 : vector<8x64xf32>
    %cst_20 = arith.constant 0.000000e+00 : f32
    %46 = vector.broadcast %cst_20 : f32 to vector<8x64xf32>
    %47 = arith.maximumf %45, %46 : vector<8x64xf32>
    %48 = arith.truncf %47 : vector<8x64xf32> to vector<8x64xbf16>
    %cst_21 = arith.constant dense<0.000000e+00> : vector<8x64xf32>
    %49 = tpu.matmul %48, %9, %cst_21 {dimension_numbers = #tpu.dot_dimension_numbers<[1], [0], [0], [1], [0, 0, 1, 1], [], []>} : vector<8x64xbf16>, vector<64x64xbf16>, vector<8x64xf32> -> vector<8x64xf32>
    %50 = vector.extract_strided_slice %8 {offsets = [48, 0], sizes = [8, 64], strides = [1, 1]} : vector<80x64xf32> to vector<8x64xf32>
    %51 = arith.addf %50, %49 : vector<8x64xf32>
    %cst_22 = arith.constant 0.000000e+00 : f32
    %52 = vector.broadcast %cst_22 : f32 to vector<8x64xf32>
    %53 = arith.maximumf %51, %52 : vector<8x64xf32>
    %54 = arith.truncf %53 : vector<8x64xf32> to vector<8x64xbf16>
    %cst_23 = arith.constant dense<0.000000e+00> : vector<8x64xf32>
    %55 = tpu.matmul %54, %9, %cst_23 {dimension_numbers = #tpu.dot_dimension_numbers<[1], [0], [0], [1], [0, 0, 1, 1], [], []>} : vector<8x64xbf16>, vector<64x64xbf16>, vector<8x64xf32> -> vector<8x64xf32>
    %56 = vector.extract_strided_slice %8 {offsets = [56, 0], sizes = [8, 64], strides = [1, 1]} : vector<80x64xf32> to vector<8x64xf32>
    %57 = arith.addf %56, %55 : vector<8x64xf32>
    %cst_24 = arith.constant 0.000000e+00 : f32
    %58 = vector.broadcast %cst_24 : f32 to vector<8x64xf32>
    %59 = arith.maximumf %57, %58 : vector<8x64xf32>
    %60 = arith.truncf %59 : vector<8x64xf32> to vector<8x64xbf16>
    %cst_25 = arith.constant dense<0.000000e+00> : vector<8x64xf32>
    %61 = tpu.matmul %60, %9, %cst_25 {dimension_numbers = #tpu.dot_dimension_numbers<[1], [0], [0], [1], [0, 0, 1, 1], [], []>} : vector<8x64xbf16>, vector<64x64xbf16>, vector<8x64xf32> -> vector<8x64xf32>
    %62 = vector.extract_strided_slice %8 {offsets = [64, 0], sizes = [8, 64], strides = [1, 1]} : vector<80x64xf32> to vector<8x64xf32>
    %63 = arith.addf %62, %61 : vector<8x64xf32>
    %cst_26 = arith.constant 0.000000e+00 : f32
    %64 = vector.broadcast %cst_26 : f32 to vector<8x64xf32>
    %65 = arith.maximumf %63, %64 : vector<8x64xf32>
    %66 = arith.truncf %65 : vector<8x64xf32> to vector<8x64xbf16>
    %cst_27 = arith.constant dense<0.000000e+00> : vector<8x64xf32>
    %67 = tpu.matmul %66, %9, %cst_27 {dimension_numbers = #tpu.dot_dimension_numbers<[1], [0], [0], [1], [0, 0, 1, 1], [], []>} : vector<8x64xbf16>, vector<64x64xbf16>, vector<8x64xf32> -> vector<8x64xf32>
    %68 = vector.extract_strided_slice %8 {offsets = [72, 0], sizes = [8, 64], strides = [1, 1]} : vector<80x64xf32> to vector<8x64xf32>
    %69 = arith.addf %68, %67 : vector<8x64xf32>
    %cst_28 = arith.constant 0.000000e+00 : f32
    %70 = vector.broadcast %cst_28 : f32 to vector<8x64xf32>
    %71 = arith.maximumf %69, %70 : vector<8x64xf32>
    %72 = arith.truncf %71 : vector<8x64xf32> to vector<8x64xbf16>
    %cst_29 = arith.constant dense<0.000000e+00> : vector<8x64xf32>
    %73 = tpu.matmul %72, %9, %cst_29 {dimension_numbers = #tpu.dot_dimension_numbers<[1], [0], [0], [1], [0, 0, 1, 1], [], []>} : vector<8x64xbf16>, vector<64x64xbf16>, vector<8x64xf32> -> vector<8x64xf32>
    %74 = vector.broadcast %2 : vector<1x64xf32> to vector<8x64xf32>
    %75 = arith.addf %74, %73 : vector<8x64xf32>
    %cst_30 = arith.constant 0.000000e+00 : f32
    %76 = vector.broadcast %cst_30 : f32 to vector<8x64xf32>
    %77 = arith.maximumf %75, %76 : vector<8x64xf32>
    %cst_31 = arith.constant dense<0.000000e+00> : vector<8x128xf32>
    %78 = tpu.matmul %77, %3, %cst_31 {dimension_numbers = #tpu.dot_dimension_numbers<[1], [0], [0], [1], [0, 0, 1, 1], [], []>} : vector<8x64xf32>, vector<64x128xf32>, vector<8x128xf32> -> vector<8x128xf32>
    %79 = vector.broadcast %4 : vector<1x128xf32> to vector<8x128xf32>
    %80 = arith.addf %78, %79 : vector<8x128xf32>
    %c0_32 = arith.constant 0 : index
    %c0_33 = arith.constant 0 : index
    %81 = vector.load %arg3[%c0_32, %c0_33] : memref<8x128xf32, #tpu.memory_space<vmem>>, vector<8x128xf32>
    tpu.vector_store %arg3[%c0_32, %c0_33], %80 {strides = array<i32>} : memref<8x128xf32, #tpu.memory_space<vmem>>, vector<8x128xf32>,
    return
  }
}

</mosaic_0001>

<llo_original>
// kernel: simple_rnn_forward.1
$region0: #{simple_rnn_forward.1}
  #allocation0 [shape = 'u32[]', space=smem, size = 0x4, offset = 0x4, fixed_abs, tag = 'smem constant byte address 0x4 - core index']
  #allocation1 [shape = 'u32[144,128]{1,0:T(1,128)}', space=vmem, size = 0x12000, scoped, tag = 'internal scratch']
  %s0 = inlined_call_operand.vmem [shape: f32[80,1], index: 0, kind: input, shape index: {}]
  %s1 = inlined_call_operand.vmem [shape: f32[66,64], index: 1, kind: input, shape index: {}]
  %s2 = inlined_call_operand.vmem [shape: f32[65,128], index: 2, kind: input, shape index: {}]
  %s3 = inlined_call_operand.vmem [shape: f32[8,128], index: 3, kind: output, shape index: {}]
  %s4 = sld [smem:[#allocation0]]
  $region22: #{simple_rnn_forward.1} parent=0
    _
  %s6 = ssub.s32 1, %s4
  %s7 = scalar_select 0, %s6, %s4
  // Predicated region
  $region2: #{simple_rnn_forward.1} parent=0 // pred_check
    _
  $region3: #{simple_rnn_forward.1} parent=0 // pred_check_branch
    %9 = sbr.rel (0) target = $region5
  $region4: #{simple_rnn_forward.1} parent=0 // pred_region
    _
  $region5: #{simple_rnn_forward.1} parent=0 // pred_fallthru
    _
  // Predicated region
  $region6: #{simple_rnn_forward.1} parent=0 // pred_check
    _
  $region7: #{simple_rnn_forward.1} parent=0 // pred_check_branch
    %11 = sbr.rel (0) target = $region9
  $region8: #{simple_rnn_forward.1} parent=0 // pred_region
    _
  $region9: #{simple_rnn_forward.1} parent=0 // pred_fallthru
    _
  // Predicated region
  $region10: #{simple_rnn_forward.1} parent=0 // pred_check
    _
  $region11: #{simple_rnn_forward.1} parent=0 // pred_check_branch
    %13 = sbr.rel (0) target = $region13
  $region12: #{simple_rnn_forward.1} parent=0 // pred_region
    _
  $region13: #{simple_rnn_forward.1} parent=0 // pred_fallthru
    _
  %v15 = vld [vmem:[%s1] sm:$0xff]
  %v16 = vld [vmem:[%s1 + $0x8] sm:$0xff]
  %v17 = vld [vmem:[%s1 + $0x10] sm:$0xff]
  %v18 = vld [vmem:[%s1 + $0x18] sm:$0xff]
  %v19 = vld [vmem:[%s1 + $0x20] sm:$0xff]
  %v20 = vld [vmem:[%s1 + $0x28] sm:$0xff]
  %v21 = vld [vmem:[%s1 + $0x30] sm:$0xff]
  %v22 = vld [vmem:[%s1 + $0x38] sm:$0xff]
  %v23 = vld [vmem:[%s1 + $0x40] sm:$0x1]
  %v24 = vld [vmem:[%s1 + $0x41] sm:$0x1]
  %v25 = vld [vmem:[%s2] sm:$0xff]
  %v26 = vld [vmem:[%s2 + $0x8] sm:$0xff]
  %v27 = vld [vmem:[%s2 + $0x10] sm:$0xff]
  %v28 = vld [vmem:[%s2 + $0x18] sm:$0xff]
  %v29 = vld [vmem:[%s2 + $0x20] sm:$0xff]
  %v30 = vld [vmem:[%s2 + $0x28] sm:$0xff]
  %v31 = vld [vmem:[%s2 + $0x30] sm:$0xff]
  %v32 = vld [vmem:[%s2 + $0x38] sm:$0xff]
  %v33 = vld [vmem:[%s2 + $0x40] sm:$0x1]
  %v34 = vld [vmem:[%s0] sm:$0xff]
  %v35 = vld [vmem:[%s0 + $0x8] sm:$0xff]
  %v36 = vld [vmem:[%s0 + $0x10] sm:$0xff]
  %v37 = vld [vmem:[%s0 + $0x18] sm:$0xff]
  %v38 = vld [vmem:[%s0 + $0x20] sm:$0xff]
  %v39 = vld [vmem:[%s0 + $0x28] sm:$0xff]
  %v40 = vld [vmem:[%s0 + $0x30] sm:$0xff]
  %v41 = vld [vmem:[%s0 + $0x38] sm:$0xff]
  %v42 = vld [vmem:[%s0 + $0x40] sm:$0xff]
  %v43 = vld [vmem:[%s0 + $0x48] sm:$0xff]
  %v44 = vlaneseq
  %v45 = vshrl.u32 %v44, 7
  %v46 = vsub.s32 0, %v45
  %v47 = vrot.slane %v24, %v46
  %vm48 = vcmask 7168
  %v50 = vsel %vm48, %v34, 0
  %v53 = vsel %vm48, %v35, 0
  %v56 = vsel %vm48, %v36, 0
  %v59 = vsel %vm48, %v37, 0
  %v62 = vsel %vm48, %v38, 0
  %v65 = vsel %vm48, %v39, 0
  %v68 = vsel %vm48, %v40, 0
  %v71 = vsel %vm48, %v41, 0
  %v74 = vsel %vm48, %v42, 0
  %v77 = vsel %vm48, %v43, 0
  %vm79 = vcmask 1040384
  %v81 = vsel %vm79, %v23, 0
  %83 = vmatprep.subr.mxu0 0.0
  %84 = vmatpush1.msra.mxu0 %v81
  %85 = vmatprep.subr.mxu0 0.0
  %86 = vmatpush1.msra.mxu0 0.0
  %87 = vmatprep.subr.mxu0 0.0
  %88 = vmatpush1.msra.mxu0 0.0
  %89 = vmatprep.subr.mxu0 0.0
  %90 = vmatpush1.msra.mxu0 0.0
  %91 = vmatprep.subr.mxu0 0.0
  %92 = vmatpush1.msra.mxu0 0.0
  %93 = vmatprep.subr.mxu0 0.0
  %94 = vmatpush1.msra.mxu0 0.0
  %95 = vmatprep.subr.mxu0 0.0
  %96 = vmatpush1.msra.mxu0 0.0
  %97 = vmatprep.subr.mxu0 0.0
  %98 = vmatpush1.msra.mxu0 0.0
  %99 = vmatprep.subr.mxu0 0.0
  %100 = vmatpush1.msra.mxu0 0.0
  %101 = vmatprep.subr.mxu0 0.0
  %102 = vmatpush1.msra.mxu0 0.0
  %103 = vmatprep.subr.mxu0 0.0
  %104 = vmatpush1.msra.mxu0 0.0
  %105 = vmatprep.subr.mxu0 0.0
  %106 = vmatpush1.msra.mxu0 0.0
  %107 = vmatprep.subr.mxu0 0.0
  %108 = vmatpush1.msra.mxu0 0.0
  %109 = vmatprep.subr.mxu0 0.0
  %110 = vmatpush1.msra.mxu0 0.0
  %111 = vmatprep.subr.mxu0 0.0
  %112 = vmatpush1.msra.mxu0 0.0
  %113 = vmatprep.subr.mxu0 0.0
  %114 = vmatpush1.msra.mxu0 0.0
  %115 = vmatprep.subr.mxu0 0.0
  %116 = vmatpush1.msra.mxu0 0.0
  %117 = vmatprep.subr.mxu0 0.0
  %118 = vmatpush1.msra.mxu0 0.0
  %119 = vmatprep.subr.mxu0 0.0
  %120 = vmatpush1.msra.mxu0 0.0
  %121 = vmatprep.subr.mxu0 0.0
  %122 = vmatpush1.msra.mxu0 0.0
  %123 = vmatprep.subr.mxu0 0.0
  %124 = vmatpush1.msra.mxu0 0.0
  %125 = vmatprep.subr.mxu0 0.0
  %126 = vmatpush1.msra.mxu0 0.0
  %127 = vmatprep.subr.mxu0 0.0
  %128 = vmatpush1.msra.mxu0 0.0
  %129 = vmatprep.subr.mxu0 0.0
  %130 = vmatpush1.msra.mxu0 0.0
  %131 = vmatprep.subr.mxu0 0.0
  %132 = vmatpush1.msra.mxu0 0.0
  %133 = vmatprep.subr.mxu0 0.0
  %134 = vmatpush1.msra.mxu0 0.0
  %135 = vmatprep.subr.mxu0 0.0
  %136 = vmatpush1.msra.mxu0 0.0
  %137 = vmatprep.subr.mxu0 0.0
  %138 = vmatpush1.msra.mxu0 0.0
  %139 = vmatprep.subr.mxu0 0.0
  %140 = vmatpush1.msra.mxu0 0.0
  %141 = vmatprep.subr.mxu0 0.0
  %142 = vmatpush1.msra.mxu0 0.0
  %143 = vmatprep.subr.mxu0 0.0
  %144 = vmatpush1.msra.mxu0 0.0
  %145 = vmatprep.subr.mxu0 0.0
  %146 = vmatpush1.msra.mxu0 0.0
  %147 = vmatprep.mubr.f32.mxu0 0.0
  %148 = vmatmul.mubr.f32.gmra.mrb[0].mxu0 %v50
  %v149 = vpop.f32.mrb[0].mxu0
  %v150 = vadd.f32 %v47, %v149
  %v151 = vpop.f32.mrb[0].mxu0
  %152 = vmatprep.mubr.f32.mxu0 0.0
  %153 = vmatmul.mubr.f32.gmra.mrb[0].mxu0 %v53
  %v154 = vpop.f32.mrb[0].mxu0
  %v155 = vadd.f32 %v47, %v154
  %v156 = vpop.f32.mrb[0].mxu0
  %157 = vmatprep.mubr.f32.mxu0 0.0
  %158 = vmatmul.mubr.f32.gmra.mrb[0].mxu0 %v56
  %v159 = vpop.f32.mrb[0].mxu0
  %v160 = vadd.f32 %v47, %v159
  %v161 = vpop.f32.mrb[0].mxu0
  %162 = vmatprep.mubr.f32.mxu0 0.0
  %163 = vmatmul.mubr.f32.gmra.mrb[0].mxu0 %v59
  %v164 = vpop.f32.mrb[0].mxu0
  %v165 = vadd.f32 %v47, %v164
  %v166 = vpop.f32.mrb[0].mxu0
  %167 = vmatprep.mubr.f32.mxu0 0.0
  %168 = vmatmul.mubr.f32.gmra.mrb[0].mxu0 %v62
  %v169 = vpop.f32.mrb[0].mxu0
  %v170 = vadd.f32 %v47, %v169
  %v171 = vpop.f32.mrb[0].mxu0
  %172 = vmatprep.mubr.f32.mxu0 0.0
  %173 = vmatmul.mubr.f32.gmra.mrb[0].mxu0 %v65
  %v174 = vpop.f32.mrb[0].mxu0
  %v175 = vadd.f32 %v47, %v174
  %v176 = vpop.f32.mrb[0].mxu0
  %177 = vmatprep.mubr.f32.mxu0 0.0
  %178 = vmatmul.mubr.f32.gmra.mrb[0].mxu0 %v68
  %v179 = vpop.f32.mrb[0].mxu0
  %v180 = vadd.f32 %v47, %v179
  %v181 = vpop.f32.mrb[0].mxu0
  %182 = vmatprep.mubr.f32.mxu0 0.0
  %183 = vmatmul.mubr.f32.gmra.mrb[0].mxu0 %v71
  %v184 = vpop.f32.mrb[0].mxu0
  %v185 = vadd.f32 %v47, %v184
  %v186 = vpop.f32.mrb[0].mxu0
  %187 = vmatprep.mubr.f32.mxu0 0.0
  %188 = vmatmul.mubr.f32.gmra.mrb[0].mxu0 %v74
  %v189 = vpop.f32.mrb[0].mxu0
  %v190 = vadd.f32 %v47, %v189
  %v191 = vpop.f32.mrb[0].mxu0
  %192 = vmatprep.mubr.f32.mxu0 0.0
  %193 = vmatmul.mubr.f32.gmra.mrb[0].mxu0 %v77
  %v194 = vpop.f32.mrb[0].mxu0
  %v195 = vadd.f32 %v47, %v194
  %v196 = vpop.f32.mrb[0].mxu0
  %197 = vdwg.mxu0
  %v198 = vpack.c.bf16 %v16, %v15
  %v199 = vpack.c.bf16 %v18, %v17
  %v200 = vpack.c.bf16 %v20, %v19
  %v201 = vpack.c.bf16 %v22, %v21
  %v202 = vlaneseq
  %v203 = vand.u32 %v202, 127
  %v204 = vmax.f32 %v150, 0.0
  %vm205 = vcmp.lt.s32.totalorder %v203, 32
  %v206 = vsel %vm205, %v204, 0.0
  %v207 = vpack.c.bf16 %v206, %v206
  %vm208 = vcmask 523264
  %v210 = vsel %vm208, %v207, 0
  %212 = vmatprep.subr.bf16.mxu0 0
  %213 = vmatpush1.bf16.msra.mxu0 %v198
  %214 = vmatprep.subr.bf16.mxu0 0
  %215 = vmatpush1.bf16.msra.mxu0 %v199
  %216 = vmatprep.subr.bf16.mxu0 0
  %217 = vmatpush1.bf16.msra.mxu0 %v200
  %218 = vmatprep.subr.bf16.mxu0 0
  %219 = vmatpush1.bf16.msra.mxu0 %v201
  %220 = vmatprep.subr.bf16.mxu0 0
  %221 = vmatpush1.bf16.msra.mxu0 0
  %222 = vmatprep.subr.bf16.mxu0 0
  %223 = vmatpush1.bf16.msra.mxu0 0
  %224 = vmatprep.subr.bf16.mxu0 0
  %225 = vmatpush1.bf16.msra.mxu0 0
  %226 = vmatprep.subr.bf16.mxu0 0
  %227 = vmatpush1.bf16.msra.mxu0 0
  %228 = vmatprep.subr.bf16.mxu0 0
  %229 = vmatpush1.bf16.msra.mxu0 0
  %230 = vmatprep.subr.bf16.mxu0 0
  %231 = vmatpush1.bf16.msra.mxu0 0
  %232 = vmatprep.subr.bf16.mxu0 0
  %233 = vmatpush1.bf16.msra.mxu0 0
  %234 = vmatprep.subr.bf16.mxu0 0
  %235 = vmatpush1.bf16.msra.mxu0 0
  %236 = vmatprep.subr.bf16.mxu0 0
  %237 = vmatpush1.bf16.msra.mxu0 0
  %238 = vmatprep.subr.bf16.mxu0 0
  %239 = vmatpush1.bf16.msra.mxu0 0
  %240 = vmatprep.subr.bf16.mxu0 0
  %241 = vmatpush1.bf16.msra.mxu0 0
  %242 = vmatprep.subr.bf16.mxu0 0
  %243 = vmatpush1.bf16.msra.mxu0 0
  %244 = vmatprep.mubr.bf16.mxu0 0
  %245 = vmatmul.mubr.bf16.gmra.mrb[0].mxu0 %v210
  %v246 = vpop.f32.mrb[0].mxu0
  %v247 = vadd.f32 0.0, %v246
  %v248 = vpop.f32.mrb[0].mxu0
  %v249 = vpop.f32.mrb[0].mxu0
  %v250 = vpop.f32.mrb[0].mxu0
  %251 = vdwg.mxu0
  %v252 = vadd.f32 %v155, %v247
  %v253 = vmax.f32 %v252, 0.0
  %v254 = vpack.c.bf16 %v253, %v253
  %v256 = vsel %vm208, %v254, 0
  %258 = vmatprep.subr.bf16.mxu0 0
  %259 = vmatpush1.bf16.msra.mxu0 %v198
  %260 = vmatprep.subr.bf16.mxu0 0
  %261 = vmatpush1.bf16.msra.mxu0 %v199
  %262 = vmatprep.subr.bf16.mxu0 0
  %263 = vmatpush1.bf16.msra.mxu0 %v200
  %264 = vmatprep.subr.bf16.mxu0 0
  %265 = vmatpush1.bf16.msra.mxu0 %v201
  %266 = vmatprep.subr.bf16.mxu0 0
  %267 = vmatpush1.bf16.msra.mxu0 0
  %268 = vmatprep.subr.bf16.mxu0 0
  %269 = vmatpush1.bf16.msra.mxu0 0
  %270 = vmatprep.subr.bf16.mxu0 0
  %271 = vmatpush1.bf16.msra.mxu0 0
  %272 = vmatprep.subr.bf16.mxu0 0
  %273 = vmatpush1.bf16.msra.mxu0 0
  %274 = vmatprep.subr.bf16.mxu0 0
  %275 = vmatpush1.bf16.msra.mxu0 0
  %276 = vmatprep.subr.bf16.mxu0 0
  %277 = vmatpush1.bf16.msra.mxu0 0
  %278 = vmatprep.subr.bf16.mxu0 0
  %279 = vmatpush1.bf16.msra.mxu0 0
  %280 = vmatprep.subr.bf16.mxu0 0
  %281 = vmatpush1.bf16.msra.mxu0 0
  %282 = vmatprep.subr.bf16.mxu0 0
  %283 = vmatpush1.bf16.msra.mxu0 0
  %284 = vmatprep.subr.bf16.mxu0 0
  %285 = vmatpush1.bf16.msra.mxu0 0
  %286 = vmatprep.subr.bf16.mxu0 0
  %287 = vmatpush1.bf16.msra.mxu0 0
  %288 = vmatprep.subr.bf16.mxu0 0
  %289 = vmatpush1.bf16.msra.mxu0 0
  %290 = vmatprep.mubr.bf16.mxu0 0
  %291 = vmatmul.mubr.bf16.gmra.mrb[0].mxu0 %v256
  %v292 = vpop.f32.mrb[0].mxu0
  %v293 = vadd.f32 0.0, %v292
  %v294 = vpop.f32.mrb[0].mxu0
  %v295 = vpop.f32.mrb[0].mxu0
  %v296 = vpop.f32.mrb[0].mxu0
  %297 = vdwg.mxu0
  %v298 = vadd.f32 %v160, %v293
  %v299 = vmax.f32 %v298, 0.0
  %v300 = vpack.c.bf16 %v299, %v299
  %v302 = vsel %vm208, %v300, 0
  %304 = vmatprep.subr.bf16.mxu0 0
  %305 = vmatpush1.bf16.msra.mxu0 %v198
  %306 = vmatprep.subr.bf16.mxu0 0
  %307 = vmatpush1.bf16.msra.mxu0 %v199
  %308 = vmatprep.subr.bf16.mxu0 0
  %309 = vmatpush1.bf16.msra.mxu0 %v200
  %310 = vmatprep.subr.bf16.mxu0 0
  %311 = vmatpush1.bf16.msra.mxu0 %v201
  %312 = vmatprep.subr.bf16.mxu0 0
  %313 = vmatpush1.bf16.msra.mxu0 0
  %314 = vmatprep.subr.bf16.mxu0 0
  %315 = vmatpush1.bf16.msra.mxu0 0
  %316 = vmatprep.subr.bf16.mxu0 0
  %317 = vmatpush1.bf16.msra.mxu0 0
  %318 = vmatprep.subr.bf16.mxu0 0
  %319 = vmatpush1.bf16.msra.mxu0 0
  %320 = vmatprep.subr.bf16.mxu0 0
  %321 = vmatpush1.bf16.msra.mxu0 0
  %322 = vmatprep.subr.bf16.mxu0 0
  %323 = vmatpush1.bf16.msra.mxu0 0
  %324 = vmatprep.subr.bf16.mxu0 0
  %325 = vmatpush1.bf16.msra.mxu0 0
  %326 = vmatprep.subr.bf16.mxu0 0
  %327 = vmatpush1.bf16.msra.mxu0 0
  %328 = vmatprep.subr.bf16.mxu0 0
  %329 = vmatpush1.bf16.msra.mxu0 0
  %330 = vmatprep.subr.bf16.mxu0 0
  %331 = vmatpush1.bf16.msra.mxu0 0
  %332 = vmatprep.subr.bf16.mxu0 0
  %333 = vmatpush1.bf16.msra.mxu0 0
  %334 = vmatprep.subr.bf16.mxu0 0
  %335 = vmatpush1.bf16.msra.mxu0 0
  %336 = vmatprep.mubr.bf16.mxu0 0
  %337 = vmatmul.mubr.bf16.gmra.mrb[0].mxu0 %v302
  %v338 = vpop.f32.mrb[0].mxu0
  %v339 = vadd.f32 0.0, %v338
  %v340 = vpop.f32.mrb[0].mxu0
  %v341 = vpop.f32.mrb[0].mxu0
  %v342 = vpop.f32.mrb[0].mxu0
  %343 = vdwg.mxu0
  %v344 = vadd.f32 %v165, %v339
  %v345 = vmax.f32 %v344, 0.0
  %v346 = vpack.c.bf16 %v345, %v345
  %v348 = vsel %vm208, %v346, 0
  %350 = vmatprep.subr.bf16.mxu0 0
  %351 = vmatpush1.bf16.msra.mxu0 %v198
  %352 = vmatprep.subr.bf16.mxu0 0
  %353 = vmatpush1.bf16.msra.mxu0 %v199
  %354 = vmatprep.subr.bf16.mxu0 0
  %355 = vmatpush1.bf16.msra.mxu0 %v200
  %356 = vmatprep.subr.bf16.mxu0 0
  %357 = vmatpush1.bf16.msra.mxu0 %v201
  %358 = vmatprep.subr.bf16.mxu0 0
  %359 = vmatpush1.bf16.msra.mxu0 0
  %360 = vmatprep.subr.bf16.mxu0 0
  %361 = vmatpush1.bf16.msra.mxu0 0
  %362 = vmatprep.subr.bf16.mxu0 0
  %363 = vmatpush1.bf16.msra.mxu0 0
  %364 = vmatprep.subr.bf16.mxu0 0
  %365 = vmatpush1.bf16.msra.mxu0 0
  %366 = vmatprep.subr.bf16.mxu0 0
  %367 = vmatpush1.bf16.msra.mxu0 0
  %368 = vmatprep.subr.bf16.mxu0 0
  %369 = vmatpush1.bf16.msra.mxu0 0
  %370 = vmatprep.subr.bf16.mxu0 0
  %371 = vmatpush1.bf16.msra.mxu0 0
  %372 = vmatprep.subr.bf16.mxu0 0
  %373 = vmatpush1.bf16.msra.mxu0 0
  %374 = vmatprep.subr.bf16.mxu0 0
  %375 = vmatpush1.bf16.msra.mxu0 0
  %376 = vmatprep.subr.bf16.mxu0 0
  %377 = vmatpush1.bf16.msra.mxu0 0
  %378 = vmatprep.subr.bf16.mxu0 0
  %379 = vmatpush1.bf16.msra.mxu0 0
  %380 = vmatprep.subr.bf16.mxu0 0
  %381 = vmatpush1.bf16.msra.mxu0 0
  %382 = vmatprep.mubr.bf16.mxu0 0
  %383 = vmatmul.mubr.bf16.gmra.mrb[0].mxu0 %v348
  %v384 = vpop.f32.mrb[0].mxu0
  %v385 = vadd.f32 0.0, %v384
  %v386 = vpop.f32.mrb[0].mxu0
  %v387 = vpop.f32.mrb[0].mxu0
  %v388 = vpop.f32.mrb[0].mxu0
  %389 = vdwg.mxu0
  %v390 = vadd.f32 %v170, %v385
  %v391 = vmax.f32 %v390, 0.0
  %v392 = vpack.c.bf16 %v391, %v391
  %v394 = vsel %vm208, %v392, 0
  %396 = vmatprep.subr.bf16.mxu0 0
  %397 = vmatpush1.bf16.msra.mxu0 %v198
  %398 = vmatprep.subr.bf16.mxu0 0
  %399 = vmatpush1.bf16.msra.mxu0 %v199
  %400 = vmatprep.subr.bf16.mxu0 0
  %401 = vmatpush1.bf16.msra.mxu0 %v200
  %402 = vmatprep.subr.bf16.mxu0 0
  %403 = vmatpush1.bf16.msra.mxu0 %v201
  %404 = vmatprep.subr.bf16.mxu0 0
  %405 = vmatpush1.bf16.msra.mxu0 0
  %406 = vmatprep.subr.bf16.mxu0 0
  %407 = vmatpush1.bf16.msra.mxu0 0
  %408 = vmatprep.subr.bf16.mxu0 0
  %409 = vmatpush1.bf16.msra.mxu0 0
  %410 = vmatprep.subr.bf16.mxu0 0
  %411 = vmatpush1.bf16.msra.mxu0 0
  %412 = vmatprep.subr.bf16.mxu0 0
  %413 = vmatpush1.bf16.msra.mxu0 0
  %414 = vmatprep.subr.bf16.mxu0 0
  %415 = vmatpush1.bf16.msra.mxu0 0
  %416 = vmatprep.subr.bf16.mxu0 0
  %417 = vmatpush1.bf16.msra.mxu0 0
  %418 = vmatprep.subr.bf16.mxu0 0
  %419 = vmatpush1.bf16.msra.mxu0 0
  %420 = vmatprep.subr.bf16.mxu0 0
  %421 = vmatpush1.bf16.msra.mxu0 0
  %422 = vmatprep.subr.bf16.mxu0 0
  %423 = vmatpush1.bf16.msra.mxu0 0
  %424 = vmatprep.subr.bf16.mxu0 0
  %425 = vmatpush1.bf16.msra.mxu0 0
  %426 = vmatprep.subr.bf16.mxu0 0
  %427 = vmatpush1.bf16.msra.mxu0 0
  %428 = vmatprep.mubr.bf16.mxu0 0
  %429 = vmatmul.mubr.bf16.gmra.mrb[0].mxu0 %v394
  %v430 = vpop.f32.mrb[0].mxu0
  %v431 = vadd.f32 0.0, %v430
  %v432 = vpop.f32.mrb[0].mxu0
  %v433 = vpop.f32.mrb[0].mxu0
  %v434 = vpop.f32.mrb[0].mxu0
  %435 = vdwg.mxu0
  %v436 = vadd.f32 %v175, %v431
  %v437 = vmax.f32 %v436, 0.0
  %v438 = vpack.c.bf16 %v437, %v437
  %v440 = vsel %vm208, %v438, 0
  %442 = vmatprep.subr.bf16.mxu0 0
  %443 = vmatpush1.bf16.msra.mxu0 %v198
  %444 = vmatprep.subr.bf16.mxu0 0
  %445 = vmatpush1.bf16.msra.mxu0 %v199
  %446 = vmatprep.subr.bf16.mxu0 0
  %447 = vmatpush1.bf16.msra.mxu0 %v200
  %448 = vmatprep.subr.bf16.mxu0 0
  %449 = vmatpush1.bf16.msra.mxu0 %v201
  %450 = vmatprep.subr.bf16.mxu0 0
  %451 = vmatpush1.bf16.msra.mxu0 0
  %452 = vmatprep.subr.bf16.mxu0 0
  %453 = vmatpush1.bf16.msra.mxu0 0
  %454 = vmatprep.subr.bf16.mxu0 0
  %455 = vmatpush1.bf16.msra.mxu0 0
  %456 = vmatprep.subr.bf16.mxu0 0
  %457 = vmatpush1.bf16.msra.mxu0 0
  %458 = vmatprep.subr.bf16.mxu0 0
  %459 = vmatpush1.bf16.msra.mxu0 0
  %460 = vmatprep.subr.bf16.mxu0 0
  %461 = vmatpush1.bf16.msra.mxu0 0
  %462 = vmatprep.subr.bf16.mxu0 0
  %463 = vmatpush1.bf16.msra.mxu0 0
  %464 = vmatprep.subr.bf16.mxu0 0
  %465 = vmatpush1.bf16.msra.mxu0 0
  %466 = vmatprep.subr.bf16.mxu0 0
  %467 = vmatpush1.bf16.msra.mxu0 0
  %468 = vmatprep.subr.bf16.mxu0 0
  %469 = vmatpush1.bf16.msra.mxu0 0
  %470 = vmatprep.subr.bf16.mxu0 0
  %471 = vmatpush1.bf16.msra.mxu0 0
  %472 = vmatprep.subr.bf16.mxu0 0
  %473 = vmatpush1.bf16.msra.mxu0 0
  %474 = vmatprep.mubr.bf16.mxu0 0
  %475 = vmatmul.mubr.bf16.gmra.mrb[0].mxu0 %v440
  %v476 = vpop.f32.mrb[0].mxu0
  %v477 = vadd.f32 0.0, %v476
  %v478 = vpop.f32.mrb[0].mxu0
  %v479 = vpop.f32.mrb[0].mxu0
  %v480 = vpop.f32.mrb[0].mxu0
  %481 = vdwg.mxu0
  %v482 = vadd.f32 %v180, %v477
  %v483 = vmax.f32 %v482, 0.0
  %v484 = vpack.c.bf16 %v483, %v483
  %v486 = vsel %vm208, %v484, 0
  %488 = vmatprep.subr.bf16.mxu0 0
  %489 = vmatpush1.bf16.msra.mxu0 %v198
  %490 = vmatprep.subr.bf16.mxu0 0
  %491 = vmatpush1.bf16.msra.mxu0 %v199
  %492 = vmatprep.subr.bf16.mxu0 0
  %493 = vmatpush1.bf16.msra.mxu0 %v200
  %494 = vmatprep.subr.bf16.mxu0 0
  %495 = vmatpush1.bf16.msra.mxu0 %v201
  %496 = vmatprep.subr.bf16.mxu0 0
  %497 = vmatpush1.bf16.msra.mxu0 0
  %498 = vmatprep.subr.bf16.mxu0 0
  %499 = vmatpush1.bf16.msra.mxu0 0
  %500 = vmatprep.subr.bf16.mxu0 0
  %501 = vmatpush1.bf16.msra.mxu0 0
  %502 = vmatprep.subr.bf16.mxu0 0
  %503 = vmatpush1.bf16.msra.mxu0 0
  %504 = vmatprep.subr.bf16.mxu0 0
  %505 = vmatpush1.bf16.msra.mxu0 0
  %506 = vmatprep.subr.bf16.mxu0 0
  %507 = vmatpush1.bf16.msra.mxu0 0
  %508 = vmatprep.subr.bf16.mxu0 0
  %509 = vmatpush1.bf16.msra.mxu0 0
  %510 = vmatprep.subr.bf16.mxu0 0
  %511 = vmatpush1.bf16.msra.mxu0 0
  %512 = vmatprep.subr.bf16.mxu0 0
  %513 = vmatpush1.bf16.msra.mxu0 0
  %514 = vmatprep.subr.bf16.mxu0 0
  %515 = vmatpush1.bf16.msra.mxu0 0
  %516 = vmatprep.subr.bf16.mxu0 0
  %517 = vmatpush1.bf16.msra.mxu0 0
  %518 = vmatprep.subr.bf16.mxu0 0
  %519 = vmatpush1.bf16.msra.mxu0 0
  %520 = vmatprep.mubr.bf16.mxu0 0
  %521 = vmatmul.mubr.bf16.gmra.mrb[0].mxu0 %v486
  %v522 = vpop.f32.mrb[0].mxu0
  %v523 = vadd.f32 0.0, %v522
  %v524 = vpop.f32.mrb[0].mxu0
  %v525 = vpop.f32.mrb[0].mxu0
  %v526 = vpop.f32.mrb[0].mxu0
  %527 = vdwg.mxu0
  %v528 = vadd.f32 %v185, %v523
  %v529 = vmax.f32 %v528, 0.0
  %v530 = vpack.c.bf16 %v529, %v529
  %v532 = vsel %vm208, %v530, 0
  %534 = vmatprep.subr.bf16.mxu0 0
  %535 = vmatpush1.bf16.msra.mxu0 %v198
  %536 = vmatprep.subr.bf16.mxu0 0
  %537 = vmatpush1.bf16.msra.mxu0 %v199
  %538 = vmatprep.subr.bf16.mxu0 0
  %539 = vmatpush1.bf16.msra.mxu0 %v200
  %540 = vmatprep.subr.bf16.mxu0 0
  %541 = vmatpush1.bf16.msra.mxu0 %v201
  %542 = vmatprep.subr.bf16.mxu0 0
  %543 = vmatpush1.bf16.msra.mxu0 0
  %544 = vmatprep.subr.bf16.mxu0 0
  %545 = vmatpush1.bf16.msra.mxu0 0
  %546 = vmatprep.subr.bf16.mxu0 0
  %547 = vmatpush1.bf16.msra.mxu0 0
  %548 = vmatprep.subr.bf16.mxu0 0
  %549 = vmatpush1.bf16.msra.mxu0 0
  %550 = vmatprep.subr.bf16.mxu0 0
  %551 = vmatpush1.bf16.msra.mxu0 0
  %552 = vmatprep.subr.bf16.mxu0 0
  %553 = vmatpush1.bf16.msra.mxu0 0
  %554 = vmatprep.subr.bf16.mxu0 0
  %555 = vmatpush1.bf16.msra.mxu0 0
  %556 = vmatprep.subr.bf16.mxu0 0
  %557 = vmatpush1.bf16.msra.mxu0 0
  %558 = vmatprep.subr.bf16.mxu0 0
  %559 = vmatpush1.bf16.msra.mxu0 0
  %560 = vmatprep.subr.bf16.mxu0 0
  %561 = vmatpush1.bf16.msra.mxu0 0
  %562 = vmatprep.subr.bf16.mxu0 0
  %563 = vmatpush1.bf16.msra.mxu0 0
  %564 = vmatprep.subr.bf16.mxu0 0
  %565 = vmatpush1.bf16.msra.mxu0 0
  %566 = vmatprep.mubr.bf16.mxu0 0
  %567 = vmatmul.mubr.bf16.gmra.mrb[0].mxu0 %v532
  %v568 = vpop.f32.mrb[0].mxu0
  %v569 = vadd.f32 0.0, %v568
  %v570 = vpop.f32.mrb[0].mxu0
  %v571 = vpop.f32.mrb[0].mxu0
  %v572 = vpop.f32.mrb[0].mxu0
  %573 = vdwg.mxu0
  %v574 = vadd.f32 %v190, %v569
  %v575 = vmax.f32 %v574, 0.0
  %v576 = vpack.c.bf16 %v575, %v575
  %v578 = vsel %vm208, %v576, 0
  %580 = vmatprep.subr.bf16.mxu0 0
  %581 = vmatpush1.bf16.msra.mxu0 %v198
  %582 = vmatprep.subr.bf16.mxu0 0
  %583 = vmatpush1.bf16.msra.mxu0 %v199
  %584 = vmatprep.subr.bf16.mxu0 0
  %585 = vmatpush1.bf16.msra.mxu0 %v200
  %586 = vmatprep.subr.bf16.mxu0 0
  %587 = vmatpush1.bf16.msra.mxu0 %v201
  %588 = vmatprep.subr.bf16.mxu0 0
  %589 = vmatpush1.bf16.msra.mxu0 0
  %590 = vmatprep.subr.bf16.mxu0 0
  %591 = vmatpush1.bf16.msra.mxu0 0
  %592 = vmatprep.subr.bf16.mxu0 0
  %593 = vmatpush1.bf16.msra.mxu0 0
  %594 = vmatprep.subr.bf16.mxu0 0
  %595 = vmatpush1.bf16.msra.mxu0 0
  %596 = vmatprep.subr.bf16.mxu0 0
  %597 = vmatpush1.bf16.msra.mxu0 0
  %598 = vmatprep.subr.bf16.mxu0 0
  %599 = vmatpush1.bf16.msra.mxu0 0
  %600 = vmatprep.subr.bf16.mxu0 0
  %601 = vmatpush1.bf16.msra.mxu0 0
  %602 = vmatprep.subr.bf16.mxu0 0
  %603 = vmatpush1.bf16.msra.mxu0 0
  %604 = vmatprep.subr.bf16.mxu0 0
  %605 = vmatpush1.bf16.msra.mxu0 0
  %606 = vmatprep.subr.bf16.mxu0 0
  %607 = vmatpush1.bf16.msra.mxu0 0
  %608 = vmatprep.subr.bf16.mxu0 0
  %609 = vmatpush1.bf16.msra.mxu0 0
  %610 = vmatprep.subr.bf16.mxu0 0
  %611 = vmatpush1.bf16.msra.mxu0 0
  %612 = vmatprep.mubr.bf16.mxu0 0
  %613 = vmatmul.mubr.bf16.gmra.mrb[0].mxu0 %v578
  %v614 = vpop.f32.mrb[0].mxu0
  %v615 = vadd.f32 0.0, %v614
  %v616 = vpop.f32.mrb[0].mxu0
  %v617 = vpop.f32.mrb[0].mxu0
  %v618 = vpop.f32.mrb[0].mxu0
  %619 = vdwg.mxu0
  %v620 = vadd.f32 %v195, %v615
  %v621 = vmax.f32 %v620, 0.0
  %v622 = vpack.c.bf16 %v621, %v621
  %v624 = vsel %vm208, %v622, 0
  %626 = vmatprep.subr.bf16.mxu0 0
  %627 = vmatpush1.bf16.msra.mxu0 %v198
  %628 = vmatprep.subr.bf16.mxu0 0
  %629 = vmatpush1.bf16.msra.mxu0 %v199
  %630 = vmatprep.subr.bf16.mxu0 0
  %631 = vmatpush1.bf16.msra.mxu0 %v200
  %632 = vmatprep.subr.bf16.mxu0 0
  %633 = vmatpush1.bf16.msra.mxu0 %v201
  %634 = vmatprep.subr.bf16.mxu0 0
  %635 = vmatpush1.bf16.msra.mxu0 0
  %636 = vmatprep.subr.bf16.mxu0 0
  %637 = vmatpush1.bf16.msra.mxu0 0
  %638 = vmatprep.subr.bf16.mxu0 0
  %639 = vmatpush1.bf16.msra.mxu0 0
  %640 = vmatprep.subr.bf16.mxu0 0
  %641 = vmatpush1.bf16.msra.mxu0 0
  %642 = vmatprep.subr.bf16.mxu0 0
  %643 = vmatpush1.bf16.msra.mxu0 0
  %644 = vmatprep.subr.bf16.mxu0 0
  %645 = vmatpush1.bf16.msra.mxu0 0
  %646 = vmatprep.subr.bf16.mxu0 0
  %647 = vmatpush1.bf16.msra.mxu0 0
  %648 = vmatprep.subr.bf16.mxu0 0
  %649 = vmatpush1.bf16.msra.mxu0 0
  %650 = vmatprep.subr.bf16.mxu0 0
  %651 = vmatpush1.bf16.msra.mxu0 0
  %652 = vmatprep.subr.bf16.mxu0 0
  %653 = vmatpush1.bf16.msra.mxu0 0
  %654 = vmatprep.subr.bf16.mxu0 0
  %655 = vmatpush1.bf16.msra.mxu0 0
  %656 = vmatprep.subr.bf16.mxu0 0
  %657 = vmatpush1.bf16.msra.mxu0 0
  %658 = vmatprep.mubr.bf16.mxu0 0
  %659 = vmatmul.mubr.bf16.gmra.mrb[0].mxu0 %v624
  %v660 = vpop.f32.mrb[0].mxu0
  %v661 = vadd.f32 0.0, %v660
  %v662 = vpop.f32.mrb[0].mxu0
  %v663 = vpop.f32.mrb[0].mxu0
  %v664 = vpop.f32.mrb[0].mxu0
  %665 = vdwg.mxu0
  %v666 = vadd.f32 %v47, %v661
  %v667 = vmax.f32 %v666, 0.0
  %v668 = vlaneseq
  %v669 = vshrl.u32 %v668, 7
  %v670 = vsub.s32 0, %v669
  %v671 = vrot.slane %v33, %v670
  %v673 = vsel %vm208, %v667, 0
  %675 = vmatprep.subr.mxu0 0.0
  %676 = vmatpush1.msra.mxu0 %v25
  %677 = vmatprep.subr.mxu0 0.0
  %678 = vmatpush1.msra.mxu0 %v26
  %679 = vmatprep.subr.mxu0 0.0
  %680 = vmatpush1.msra.mxu0 %v27
  %681 = vmatprep.subr.mxu0 0.0
  %682 = vmatpush1.msra.mxu0 %v28
  %683 = vmatprep.subr.mxu0 0.0
  %684 = vmatpush1.msra.mxu0 %v29
  %685 = vmatprep.subr.mxu0 0.0
  %686 = vmatpush1.msra.mxu0 %v30
  %687 = vmatprep.subr.mxu0 0.0
  %688 = vmatpush1.msra.mxu0 %v31
  %689 = vmatprep.subr.mxu0 0.0
  %690 = vmatpush1.msra.mxu0 %v32
  %691 = vmatprep.subr.mxu0 0.0
  %692 = vmatpush1.msra.mxu0 0.0
  %693 = vmatprep.subr.mxu0 0.0
  %694 = vmatpush1.msra.mxu0 0.0
  %695 = vmatprep.subr.mxu0 0.0
  %696 = vmatpush1.msra.mxu0 0.0
  %697 = vmatprep.subr.mxu0 0.0
  %698 = vmatpush1.msra.mxu0 0.0
  %699 = vmatprep.subr.mxu0 0.0
  %700 = vmatpush1.msra.mxu0 0.0
  %701 = vmatprep.subr.mxu0 0.0
  %702 = vmatpush1.msra.mxu0 0.0
  %703 = vmatprep.subr.mxu0 0.0
  %704 = vmatpush1.msra.mxu0 0.0
  %705 = vmatprep.subr.mxu0 0.0
  %706 = vmatpush1.msra.mxu0 0.0
  %707 = vmatprep.subr.mxu0 0.0
  %708 = vmatpush1.msra.mxu0 0.0
  %709 = vmatprep.subr.mxu0 0.0
  %710 = vmatpush1.msra.mxu0 0.0
  %711 = vmatprep.subr.mxu0 0.0
  %712 = vmatpush1.msra.mxu0 0.0
  %713 = vmatprep.subr.mxu0 0.0
  %714 = vmatpush1.msra.mxu0 0.0
  %715 = vmatprep.subr.mxu0 0.0
  %716 = vmatpush1.msra.mxu0 0.0
  %717 = vmatprep.subr.mxu0 0.0
  %718 = vmatpush1.msra.mxu0 0.0
  %719 = vmatprep.subr.mxu0 0.0
  %720 = vmatpush1.msra.mxu0 0.0
  %721 = vmatprep.subr.mxu0 0.0
  %722 = vmatpush1.msra.mxu0 0.0
  %723 = vmatprep.subr.mxu0 0.0
  %724 = vmatpush1.msra.mxu0 0.0
  %725 = vmatprep.subr.mxu0 0.0
  %726 = vmatpush1.msra.mxu0 0.0
  %727 = vmatprep.subr.mxu0 0.0
  %728 = vmatpush1.msra.mxu0 0.0
  %729 = vmatprep.subr.mxu0 0.0
  %730 = vmatpush1.msra.mxu0 0.0
  %731 = vmatprep.subr.mxu0 0.0
  %732 = vmatpush1.msra.mxu0 0.0
  %733 = vmatprep.subr.mxu0 0.0
  %734 = vmatpush1.msra.mxu0 0.0
  %735 = vmatprep.subr.mxu0 0.0
  %736 = vmatpush1.msra.mxu0 0.0
  %737 = vmatprep.subr.mxu0 0.0
  %738 = vmatpush1.msra.mxu0 0.0
  %739 = vmatprep.mubr.f32.mxu0 0.0
  %740 = vmatmul.mubr.f32.gmra.mrb[0].mxu0 %v673
  %v741 = vpop.f32.mrb[0].mxu0
  %v742 = vadd.f32 %v671, %v741
  %v743 = vpop.f32.mrb[0].mxu0
  %744 = vdwg.mxu0
  %745 = vst [vmem:[%s3] sm:$0xff] %v742
  // Predicated region
  $region14: #{simple_rnn_forward.1} parent=0 // pred_check
    _
  $region15: #{simple_rnn_forward.1} parent=0 // pred_check_branch
    %747 = sbr.rel (0) target = $region17
  $region16: #{simple_rnn_forward.1} parent=0 // pred_region
    _
  $region17: #{simple_rnn_forward.1} parent=0 // pred_fallthru
    _
  // Predicated region
  $region18: #{simple_rnn_forward.1} parent=0 // pred_check
    _
  $region19: #{simple_rnn_forward.1} parent=0 // pred_check_branch
    %749 = sbr.rel (0) target = $region21
  $region20: #{simple_rnn_forward.1} parent=0 // pred_region
    _
  $region21: #{simple_rnn_forward.1} parent=0 // pred_fallthru
    _

</llo_original>
